<compile_context>
chip_gen: v7x
topology: tpu7x:2x2x1
jax: 0.10.0
libtpu: 0.0.40
codegen_flags: <defaults>
</compile_context>

<pallas_src>
import functools

import jax
import jax.numpy as jnp
from jax import lax
from jax.experimental import pallas as pl
from jax.experimental.pallas import tpu as pltpu


def _round_up(x, m):
    return ((x + m - 1) // m) * m


# ----------------------------------------------------------------------------
# Filter construction (plain JAX glue) — mirrors
# ComplexGaborFilter.gabor_impulse_response exactly.
# ----------------------------------------------------------------------------
def gabor_impulse_response(center_frequencies, inverse_bandwidths, n_coefficients):
    # t = arange(-n_coefficients // 2, n_coefficients // 2 + 1)  (unary minus binds
    # tighter than //, exactly as in the torch module) -> L = n_coefficients + 1 taps
    lo = (-n_coefficients) // 2
    hi = n_coefficients // 2 + 1
    t = jnp.arange(lo, hi, dtype=jnp.float32)                       # [L]
    bw = inverse_bandwidths.astype(jnp.float32)[:, None]            # [F, 1]
    cf = center_frequencies.astype(jnp.float32)[:, None]            # [F, 1]
    normalization = 1.0 / (jnp.sqrt(2.0 * jnp.pi) * bw)             # [F, 1]
    gaussian = jnp.exp(-(t[None, :] ** 2) / (2.0 * bw ** 2))        # [F, L]
    phase = cf * t[None, :]                                         # [F, L]
    w_real = normalization * gaussian * jnp.cos(phase)              # Re(norm*e^{i phi}*gauss)
    w_imag = normalization * gaussian * jnp.sin(phase)              # Im(...)
    return w_real, w_imag


# ----------------------------------------------------------------------------
# Pallas kernel: one (row-block, time-tile) output block.
#   x_ref   : [s, BN, Tp_pad]   resident decimated phases (bf16), rows x time
#   w_ref   : [s, 2F, L_q]      phase-split packed real/imag filters (bf16)
#   o_re_ref: [BN, F, T_TILE]   real part (f32)
#   o_im_ref: [BN, F, T_TILE]   imag part (f32)
# ----------------------------------------------------------------------------
def _gabor_conv_kernel(x_ref, w_ref, o_re_ref, o_im_ref, *, t_tile, t_win, tap_chunk):
    s, bn, _ = x_ref.shape
    two_f, l_q = w_ref.shape[1], w_ref.shape[2]
    f = o_re_ref.shape[1]

    j = pl.program_id(1)
    start = pl.multiple_of(j * t_tile, 128)              # 128-aligned window start

    acc = jnp.zeros((bn, two_f, t_tile), jnp.float32)
    for r in range(s):                                   # polyphase (s == stride)
        # One aligned dynamic slice per phase; everything below is static slices.
        xw = x_ref[r, :, pl.ds(start, t_win)]            # [bn, t_win] bf16
        for k0 in range(0, l_q, tap_chunk):
            kc = min(tap_chunk, l_q - k0)
            # im2col: lane-shifted copies of the window, stacked on the tap axis.
            cols = [xw[:, k:k + t_tile] for k in range(k0, k0 + kc)]
            patches = jnp.stack(cols, axis=1)            # [bn, kc, t_tile]
            wb = jnp.broadcast_to(w_ref[r:r + 1, :, k0:k0 + kc],
                                  (bn, two_f, kc))       # [bn, 2F, kc]
            # Batched MXU matmul, f32 accumulation.
            acc = acc + lax.dot_general(
                wb, patches,
                dimension_numbers=(((2,), (1,)), ((0,), (0,))),
                preferred_element_type=jnp.float32)

    o_re_ref[...] = acc[:, :f, :].astype(o_re_ref.dtype)
    o_im_ref[...] = acc[:, f:, :].astype(o_im_ref.dtype)


# ----------------------------------------------------------------------------
# Wrapper reproducing ComplexGaborFilter.forward
# ----------------------------------------------------------------------------
def complex_gabor_filter(x, center_frequencies, inverse_bandwidths,
                         n_coefficients, causal=False, stride=1,
                         compute_dtype=jnp.bfloat16):
    B, C, T = x.shape
    num_filters = int(center_frequencies.shape[0])
    filter_length = n_coefficients

    w_real, w_imag = gabor_impulse_response(center_frequencies, inverse_bandwidths,
                                            n_coefficients)
    L = w_real.shape[1]                                  # n_coefficients + 1 taps
    F_ = num_filters
    two_f = 2 * num_filters

    # x.reshape(B*C, 1, T); x.to(complex64) of a real input has zero imag part,
    # so the complex conv splits into two real correlations.
    N = B * C
    x2 = x.reshape(N, T).astype(jnp.float32)
    if causal:
        x2 = jnp.pad(x2, ((0, 0), (filter_length - 1, 0)))   # F.pad((padding, 0))
    T_eff = x2.shape[1]
    assert T_eff >= L, "input too short for the Gabor filter"
    T_out = (T_eff - L) // stride + 1                    # F.conv1d with padding=0

    s = int(stride)
    L_q = -(-L // s)                                     # taps per polyphase branch

    # ---- tiling --------------------------------------------------------------
    T_TILE = max(128, min(1024, _round_up(T_out, 128)))  # lane-dense time tile
    n_tt = pl.cdiv(T_out, T_TILE)
    T_out_pad = n_tt * T_TILE
    T_win = T_TILE + _round_up(max(L_q - 1, 0), 128)     # per-tile window incl. halo
    Tp_pad = (n_tt - 1) * T_TILE + T_win                 # resident decimated length

    BN = 8                                               # rows per block (sublane tile)
    if N >= 32 and s * 32 * Tp_pad * 2 <= (8 << 20):     # grow only if residency stays small
        BN = 32
    Npad = _round_up(N, BN)
    TAP_CHUNK = 128   # TODO(synk): bump to 256 on v6e for very long filters (L >= 256).

    # ---- wrapper-side polyphase split (keeps every in-kernel slice contiguous) --
    need = Tp_pad * s
    pad_t = max(0, need - T_eff)
    x2p = jnp.pad(x2, ((0, Npad - N), (0, pad_t)))[:, :need].astype(compute_dtype)
    x_ph = x2p.reshape(Npad, Tp_pad, s).transpose(2, 0, 1)         # [s, Npad, Tp_pad]
    # TODO(synk): for extremely long signals, chunk the per-row time residency
    # instead of keeping the whole decimated axis in one VMEM block.

    w_packed = jnp.concatenate([w_real, w_imag], axis=0)           # [2F, L] f32
    w_pad = jnp.pad(w_packed, ((0, 0), (0, L_q * s - L)))
    w_ph = w_pad.reshape(two_f, L_q, s).transpose(2, 0, 1).astype(compute_dtype)  # [s,2F,L_q]

    kernel = functools.partial(_gabor_conv_kernel,
                               t_tile=T_TILE, t_win=T_win, tap_chunk=TAP_CHUNK)

    bpe = jnp.dtype(compute_dtype).itemsize
    vmem_est = (2 * s * BN * Tp_pad * bpe            # resident input, double-buffered
                + 2 * s * two_f * L_q * bpe          # weights
                + 2 * 2 * BN * F_ * T_TILE * 4       # two f32 outputs, double-buffered
                + s * BN * T_win * bpe               # window load
                + BN * two_f * T_TILE * 4            # f32 accumulator
                + BN * TAP_CHUNK * T_TILE * bpe      # patches chunk
                + BN * two_f * TAP_CHUNK * bpe)      # broadcast weight chunk
    vmem_limit = int(min(64 * 2 ** 20, max(32 * 2 ** 20, 2 * vmem_est)))  # v7x-safe cap

    out_re, out_im = pl.pallas_call(
        kernel,
        grid=(Npad // BN, n_tt),
        in_specs=[
            # Rows resident across all time tiles (same block index across j -> one DMA).
            pl.BlockSpec((s, BN, Tp_pad), lambda i, j: (0, i, 0)),
            pl.BlockSpec((s, two_f, L_q), lambda i, j: (0, 0, 0)),   # weights resident
        ],
        out_specs=[
            pl.BlockSpec((BN, F_, T_TILE), lambda i, j: (i, 0, j)),  # real part
            pl.BlockSpec((BN, F_, T_TILE), lambda i, j: (i, 0, j)),  # imag part
        ],
        out_shape=(jax.ShapeDtypeStruct((Npad, F_, T_out_pad), jnp.float32),
                   jax.ShapeDtypeStruct((Npad, F_, T_out_pad), jnp.float32)),
        compiler_params=pltpu.CompilerParams(
            dimension_semantics=("parallel", "parallel"),
            vmem_limit_bytes=vmem_limit,
        ),
    )(x_ph, w_ph)

    # Crop padding + recombine to complex64 (single fused XLA pass; layout is
    # already [N, F, T] so no transpose is needed).
    out = lax.complex(out_re[:N, :, :T_out], out_im[:N, :, :T_out])
    if C > 1:
        out = out.reshape(B, C, num_filters, T_out)
    # (when C == 1 the torch module returns [B, F, T_out] with no reshape)
    return out


# ----------------------------------------------------------------------------
# Pure-JAX reference (correctness sanity check only, f32)
# ----------------------------------------------------------------------------
def _reference(x2, w_real, w_imag, stride):
    N, T_eff = x2.shape
    F_, L = w_real.shape
    T_out = (T_eff - L) // stride + 1
    idx = stride * jnp.arange(T_out)[:, None] + jnp.arange(L)[None, :]   # [T_out, L]
    patches = x2[:, idx]                                                 # [N, T_out, L]
    rr = jnp.einsum("ntl,fl->nft", patches, w_real,
                    precision=jax.lax.Precision.HIGHEST)
    ri = jnp.einsum("ntl,fl->nft", patches, w_imag,
                    precision=jax.lax.Precision.HIGHEST)
    return lax.complex(rr, ri)


if __name__ == "__main__":
    key = jax.random.PRNGKey(0)
    B, C, T = 2, 4, 64
    num_filters = 8
    n_coefficients = 8

    # Deterministic "parameters" (shapes per __init__: [num_filters] each).
    center_frequencies = jnp.linspace(0.1, 0.9 * jnp.pi, num_filters, dtype=jnp.float32)
    inverse_bandwidths = jnp.linspace(1.5, 4.0, num_filters, dtype=jnp.float32)
    x = jax.random.normal(key, (B, C, T), dtype=jnp.float32)

    w_real, w_imag = gabor_impulse_response(center_frequencies, inverse_bandwidths,
                                            n_coefficients)

    def ref_forward(x_in, causal, stride):
        x2 = x_in.reshape(B * C, T)
        if causal:
            x2 = jnp.pad(x2, ((0, 0), (n_coefficients - 1, 0)))
        r = _reference(x2, w_real, w_imag, stride)
        return r.reshape(B, C, num_filters, r.shape[-1])

    configs = [
        dict(causal=False, stride=1),
        dict(causal=True, stride=1),     # exercises the left-padding branch
        dict(causal=False, stride=2),    # exercises the polyphase branch
    ]
    for cfg in configs:
        out = complex_gabor_filter(x, center_frequencies, inverse_bandwidths,
                                   n_coefficients=n_coefficients, **cfg)
        out = jax.block_until_ready(out)
        ref = ref_forward(x, cfg["causal"], cfg["stride"])
        assert out.shape == ref.shape, (cfg, out.shape, ref.shape)
        assert out.dtype == jnp.complex64, out.dtype
        # bf16 inputs / f32 accumulation -> slightly looser tolerance than pure f32.
        assert jnp.allclose(out, ref, atol=3e-2, rtol=3e-2), cfg

    print("KERNEL_OK")
</pallas_src>

<mosaic_0001>
module attributes {stable_mosaic.version = 11 : i64} {
  func.func @_gabor_conv_kernel(%arg0: i32, %arg1: i32, %arg2: memref<1x8x256xbf16, #tpu.memory_space<vmem>>, %arg3: memref<1x16x9xbf16, #tpu.memory_space<vmem>>, %arg4: memref<8x8x128xf32, #tpu.memory_space<vmem>>, %arg5: memref<8x8x128xf32, #tpu.memory_space<vmem>>) attributes {dimension_semantics = [#tpu.dimension_semantics<parallel>, #tpu.dimension_semantics<parallel>], iteration_bounds = array<i64: 1, 1>, scalar_prefetch = 0 : i64, scratch_operands = 0 : i64, tpu.core_type = #tpu.core_type<tc>, window_params = [{transform_indices = @transform_0, window_bounds = array<i64: 1, 8, 256>}, {pipeline_mode = #tpu.pipeline_mode<synchronous>, transform_indices = @transform_1, window_bounds = array<i64: 1, 16, 9>}, {transform_indices = @transform_2, window_bounds = array<i64: 8, 8, 128>}, {transform_indices = @transform_3, window_bounds = array<i64: 8, 8, 128>}]} {
    %c128_i32 = arith.constant 128 : i32
    %0 = arith.muli %arg1, %c128_i32 : i32
    %1 = tpu.assume_multiple %0, 128 : i32
    %cst = arith.constant 0.000000e+00 : f32
    %2 = vector.broadcast %cst : f32 to vector<8x16x128xf32>
    %c0 = arith.constant 0 : index
    %c0_0 = arith.constant 0 : index
    %3 = arith.index_cast %1 : i32 to index
    %4 = vector.load %arg2[%c0, %c0_0, %3] : memref<1x8x256xbf16, #tpu.memory_space<vmem>>, vector<1x8x256xbf16>
    %5 = vector.shape_cast %4 : vector<1x8x256xbf16> to vector<8x256xbf16>
    %6 = vector.extract_strided_slice %5 {offsets = [0, 0], sizes = [8, 128], strides = [1, 1]} : vector<8x256xbf16> to vector<8x128xbf16>
    %7 = vector.extract_strided_slice %5 {offsets = [0, 1], sizes = [8, 128], strides = [1, 1]} : vector<8x256xbf16> to vector<8x128xbf16>
    %8 = vector.extract_strided_slice %5 {offsets = [0, 2], sizes = [8, 128], strides = [1, 1]} : vector<8x256xbf16> to vector<8x128xbf16>
    %9 = vector.extract_strided_slice %5 {offsets = [0, 3], sizes = [8, 128], strides = [1, 1]} : vector<8x256xbf16> to vector<8x128xbf16>
    %10 = vector.extract_strided_slice %5 {offsets = [0, 4], sizes = [8, 128], strides = [1, 1]} : vector<8x256xbf16> to vector<8x128xbf16>
    %11 = vector.extract_strided_slice %5 {offsets = [0, 5], sizes = [8, 128], strides = [1, 1]} : vector<8x256xbf16> to vector<8x128xbf16>
    %12 = vector.extract_strided_slice %5 {offsets = [0, 6], sizes = [8, 128], strides = [1, 1]} : vector<8x256xbf16> to vector<8x128xbf16>
    %13 = vector.extract_strided_slice %5 {offsets = [0, 7], sizes = [8, 128], strides = [1, 1]} : vector<8x256xbf16> to vector<8x128xbf16>
    %14 = vector.extract_strided_slice %5 {offsets = [0, 8], sizes = [8, 128], strides = [1, 1]} : vector<8x256xbf16> to vector<8x128xbf16>
    %15 = vector.shape_cast %6 : vector<8x128xbf16> to vector<8x1x128xbf16>
    %16 = vector.shape_cast %7 : vector<8x128xbf16> to vector<8x1x128xbf16>
    %17 = vector.shape_cast %8 : vector<8x128xbf16> to vector<8x1x128xbf16>
    %18 = vector.shape_cast %9 : vector<8x128xbf16> to vector<8x1x128xbf16>
    %19 = vector.shape_cast %10 : vector<8x128xbf16> to vector<8x1x128xbf16>
    %20 = vector.shape_cast %11 : vector<8x128xbf16> to vector<8x1x128xbf16>
    %21 = vector.shape_cast %12 : vector<8x128xbf16> to vector<8x1x128xbf16>
    %22 = vector.shape_cast %13 : vector<8x128xbf16> to vector<8x1x128xbf16>
    %23 = vector.shape_cast %14 : vector<8x128xbf16> to vector<8x1x128xbf16>
    %24 = tpu.concatenate %15, %16, %17, %18, %19, %20, %21, %22, %23 in 1 : vector<8x1x128xbf16>, vector<8x1x128xbf16>, vector<8x1x128xbf16>, vector<8x1x128xbf16>, vector<8x1x128xbf16>, vector<8x1x128xbf16>, vector<8x1x128xbf16>, vector<8x1x128xbf16>, vector<8x1x128xbf16> -> vector<8x9x128xbf16>
    %c0_1 = arith.constant 0 : index
    %c0_2 = arith.constant 0 : index
    %c0_3 = arith.constant 0 : index
    %25 = vector.load %arg3[%c0_1, %c0_2, %c0_3] : memref<1x16x9xbf16, #tpu.memory_space<vmem>>, vector<1x16x9xbf16>
    %26 = vector.shape_cast %25 : vector<1x16x9xbf16> to vector<1x16x9xbf16>
    %27 = vector.broadcast %26 : vector<1x16x9xbf16> to vector<8x16x9xbf16>
    %cst_4 = arith.constant dense<0.000000e+00> : vector<8x16x128xf32>
    %28 = tpu.matmul %27, %24, %cst_4 {dimension_numbers = #tpu.dot_dimension_numbers<[2], [1], [1], [2], [0, 0, 0, 1, 1, 2], [0], [0]>} : vector<8x16x9xbf16>, vector<8x9x128xbf16>, vector<8x16x128xf32> -> vector<8x16x128xf32>
    %29 = arith.addf %2, %28 : vector<8x16x128xf32>
    %30 = vector.extract_strided_slice %29 {offsets = [0, 0, 0], sizes = [8, 8, 128], strides = [1, 1, 1]} : vector<8x16x128xf32> to vector<8x8x128xf32>
    %c0_5 = arith.constant 0 : index
    %c0_6 = arith.constant 0 : index
    %c0_7 = arith.constant 0 : index
    %31 = vector.load %arg4[%c0_5, %c0_6, %c0_7] : memref<8x8x128xf32, #tpu.memory_space<vmem>>, vector<8x8x128xf32>
    tpu.vector_store %arg4[%c0_5, %c0_6, %c0_7], %30 {strides = array<i32>} : memref<8x8x128xf32, #tpu.memory_space<vmem>>, vector<8x8x128xf32>,
    %32 = vector.extract_strided_slice %29 {offsets = [0, 8, 0], sizes = [8, 8, 128], strides = [1, 1, 1]} : vector<8x16x128xf32> to vector<8x8x128xf32>
    %c0_8 = arith.constant 0 : index
    %c0_9 = arith.constant 0 : index
    %c0_10 = arith.constant 0 : index
    %33 = vector.load %arg5[%c0_8, %c0_9, %c0_10] : memref<8x8x128xf32, #tpu.memory_space<vmem>>, vector<8x8x128xf32>
    tpu.vector_store %arg5[%c0_8, %c0_9, %c0_10], %32 {strides = array<i32>} : memref<8x8x128xf32, #tpu.memory_space<vmem>>, vector<8x8x128xf32>,
    return
  }
  func.func @transform_0(%arg0: i32, %arg1: i32) -> (i32, i32, i32) {
    %c0_i32 = arith.constant 0 : i32
    %c0_i32_0 = arith.constant 0 : i32
    %c0_i32_1 = arith.constant 0 : i32
    return %c0_i32, %arg0, %c0_i32_0 : i32, i32, i32
  }
  func.func @transform_1(%arg0: i32, %arg1: i32) -> (i32, i32, i32) {
    %c0_i32 = arith.constant 0 : i32
    %c0_i32_0 = arith.constant 0 : i32
    %c0_i32_1 = arith.constant 0 : i32
    %c0_i32_2 = arith.constant 0 : i32
    return %c0_i32, %c0_i32_0, %c0_i32_1 : i32, i32, i32
  }
  func.func @transform_2(%arg0: i32, %arg1: i32) -> (i32, i32, i32) {
    %c0_i32 = arith.constant 0 : i32
    %c0_i32_0 = arith.constant 0 : i32
    return %arg0, %c0_i32, %arg1 : i32, i32, i32
  }
  func.func @transform_3(%arg0: i32, %arg1: i32) -> (i32, i32, i32) {
    %c0_i32 = arith.constant 0 : i32
    %c0_i32_0 = arith.constant 0 : i32
    return %arg0, %c0_i32, %arg1 : i32, i32, i32
  }
}

</mosaic_0001>

<llo_original>
// kernel: tpu_custom_call.1
$region0: #{tpu_custom_call.1}
  #allocation0 [shape = 'u32[]', space=smem, size = 0x4, offset = 0x4, fixed_abs, tag = 'smem constant byte address 0x4 - core index']
  #allocation1 [shape = 'u32[144,128]{1,0:T(1,128)}', space=vmem, size = 0x12000, scoped, tag = 'internal scratch']
  %s0 = inlined_call_operand.hbm [shape: bf16[1,8,256], index: 0, kind: input, shape index: {}]
  %s1 = inlined_call_operand.hbm [shape: bf16[1,16,9], index: 1, kind: input, shape index: {}]
  %s2 = inlined_call_operand.hbm [shape: f32[8,8,128], index: 2, kind: output, shape index: {0}]
  %s3 = inlined_call_operand.hbm [shape: f32[8,8,128], index: 3, kind: output, shape index: {1}]
  %4 = xla_tuple %s2, %s3
  %s5 = sld [smem:[#allocation0]]
  $region34: #{tpu_custom_call.1} parent=0
    _
  %s7 = ssub.s32 1, %s5
  %s8 = scalar_select 0, %s7, %s5
  $region1: #{tpu_custom_call.1} parent=0
    #allocation2 [shape = 'u8[4096]{0}', space=vmem, size = 0x1000, scoped, tag = 'input window, operand 0, single buffered']
    #allocation3 [shape = 's32[1]{0}', space=sflag, size = 0x4, scoped, tag = 'scoped memory for tpu_custom_call.1']
    #allocation4 [shape = 's32[1]{0}', space=sflag, size = 0x4, scoped, tag = 'scoped memory for tpu_custom_call.1']
    #allocation5 [shape = 'u8[4096]{0}', space=vmem, size = 0x1000, scoped, tag = 'input window, operand 1, single buffered']
    #allocation6 [shape = 's32[1]{0}', space=sflag, size = 0x4, scoped, tag = 'scoped memory for tpu_custom_call.1']
    #allocation7 [shape = 'u8[32768]{0}', space=vmem, size = 0x8000, scoped, tag = 'output window, operand 0, single buffered']
    #allocation8 [shape = 'u8[32768]{0}', space=vmem, size = 0x8000, scoped, tag = 'output window, operand 1, single buffered']
    #allocation9 [shape = 's32[1]{0}', space=sflag, size = 0x4, scoped, tag = 'scoped memory for tpu_custom_call.1']
    %9 = vsyncpa [#allocation3], 0
    %10 = vsyncpa [#allocation6], 0
    %11 = vsyncpa [#allocation4], 0
    %12 = vsyncpa [#allocation9], 0
    // Predicated region
    $region2: #{tpu_custom_call.1} parent=1 // pred_check
      _
    $region3: #{tpu_custom_call.1} parent=1 // pred_check_branch
      %14 = sbr.rel (0) target = $region5
    $region4: #{tpu_custom_call.1} parent=1 // pred_region
      %s16 = ssub.s32 128, 128
      %17 = vsyncadd [#allocation3], %s16
      %s19 = sshll.u32 [#allocation2], 4
      %s20 = int_to_ptr.vmem [resolvable:$true] %s19
      %22 = dma.hbm_to_vmem [thread:$0]  %s0, 128, %s20, [#allocation3]
    $region5: #{tpu_custom_call.1} parent=1 // pred_fallthru
      _
    // Predicated region
    $region6: #{tpu_custom_call.1} parent=1 // pred_check
      _
    $region7: #{tpu_custom_call.1} parent=1 // pred_check_branch
      %24 = sbr.rel (0) target = $region9
    $region8: #{tpu_custom_call.1} parent=1 // pred_region
      %s26 = ssub.s32 128, 128
      %27 = vsyncadd [#allocation6], %s26
      %s28 = sshll.u32 [#allocation5], 4
      %s29 = int_to_ptr.vmem [resolvable:$true] %s28
      %34 = dma.hbm_to_vmem [thread:$0]  %s1, 128, %s29, [#allocation6], 64, 64, 4
    $region9: #{tpu_custom_call.1} parent=1 // pred_fallthru
      _
    // Predicated region
    $region10: #{tpu_custom_call.1} parent=1 // pred_check
      _
    $region11: #{tpu_custom_call.1} parent=1 // pred_check_branch
      %36 = sbr.rel (0) target = $region13
    $region12: #{tpu_custom_call.1} parent=1 // pred_region
      %37 = dma.done [#allocation3], 128
    $region13: #{tpu_custom_call.1} parent=1 // pred_fallthru
      _
    // Predicated region
    $region14: #{tpu_custom_call.1} parent=1 // pred_check
      _
    $region15: #{tpu_custom_call.1} parent=1 // pred_check_branch
      %39 = sbr.rel (0) target = $region17
    $region16: #{tpu_custom_call.1} parent=1 // pred_region
      %40 = dma.done [#allocation6], 128
    $region17: #{tpu_custom_call.1} parent=1 // pred_fallthru
      _
    %s42 = smul.u32 0, 128
    %s43 = sshra.s32 %s42, 7
    %s44 = sand.u32 %s42, 127
    %s45 = smul.addr %s43, 4
    %s46 = scalar_lea.vmem [#allocation2], %s45
    %v47 = vld [vmem:[%s46] sm:$0xff]
    %v50 = vunpack.c.l.s4 1966171168
    %v51 = vunpack.c.0.s8 %v50
    %v52 = vlaneseq
    %v53 = vshrl.u32 %v52, 7
    %v54 = vsub.s32 %v51, %v53
    %v55 = vrot.slane %v47, %v54
    %v56 = vcombine.high %v55, %v55
    %v58 = vunpack.c.l.s4 1966171168
    %v59 = vunpack.c.0.s8 %v58
    %v60 = vlaneseq
    %v61 = vshrl.u32 %v60, 7
    %v62 = vsub.s32 %v59, %v61
    %v63 = vrot.slane %v55, %v62
    %v65 = vunpack.c.l.s4 1966171168
    %v66 = vunpack.c.0.s8 %v65
    %v67 = vlaneseq
    %v68 = vshrl.u32 %v67, 7
    %v69 = vsub.s32 %v66, %v68
    %v70 = vrot.slane %v56, %v69
    %v71 = vcombine.high %v63, %v63
    %v72 = vcombine.high %v70, %v70
    %v73 = vunpack.i.l.s16 %v63
    %v74 = vunpack.i.h.s16 %v63
    %v75 = vunpack.i.l.s16 %v70
    %v76 = vunpack.i.h.s16 %v70
    %v77 = vunpack.i.l.s16 %v71
    %v78 = vunpack.i.h.s16 %v71
    %v79 = vunpack.i.l.s16 %v72
    %v80 = vunpack.i.h.s16 %v72
    %v81 = vpack.i.b16 %v73, %v73
    %v82 = vpack.i.b16 %v74, %v74
    %v83 = vpack.i.b16 %v75, %v75
    %v84 = vpack.i.b16 %v76, %v76
    %v85 = vpack.i.b16 %v77, %v77
    %v86 = vpack.i.b16 %v78, %v78
    %v87 = vpack.i.b16 %v79, %v79
    %v88 = vpack.i.b16 %v80, %v80
    %v89 = vlaneseq
    %v90 = vshrl.u32 %v89, 7
    %v91 = vsub.s32 0, %v90
    %v92 = vrot.slane %v81, %v91
    %v93 = vlaneseq
    %v94 = vshrl.u32 %v93, 7
    %v95 = vsub.s32 0, %v94
    %v96 = vrot.slane %v82, %v95
    %v97 = vlaneseq
    %v98 = vshrl.u32 %v97, 7
    %v99 = vsub.s32 0, %v98
    %v100 = vrot.slane %v83, %v99
    %v101 = vlaneseq
    %v102 = vshrl.u32 %v101, 7
    %v103 = vsub.s32 0, %v102
    %v104 = vrot.slane %v84, %v103
    %v105 = vlaneseq
    %v106 = vshrl.u32 %v105, 7
    %v107 = vsub.s32 0, %v106
    %v108 = vrot.slane %v85, %v107
    %v109 = vlaneseq
    %v110 = vshrl.u32 %v109, 7
    %v111 = vsub.s32 0, %v110
    %v112 = vrot.slane %v86, %v111
    %v113 = vlaneseq
    %v114 = vshrl.u32 %v113, 7
    %v115 = vsub.s32 0, %v114
    %v116 = vrot.slane %v87, %v115
    %v117 = vlaneseq
    %v118 = vshrl.u32 %v117, 7
    %v119 = vsub.s32 0, %v118
    %v120 = vrot.slane %v88, %v119
    %v129 = vlaneseq
    %v130 = vshrl.u32 %v129, 7
    %v131 = vsub.s32 1, %v130
    %v132 = vrot.slane %v81, %v131
    %v133 = vlaneseq
    %v134 = vshrl.u32 %v133, 7
    %v135 = vsub.s32 1, %v134
    %v136 = vrot.slane %v82, %v135
    %v137 = vlaneseq
    %v138 = vshrl.u32 %v137, 7
    %v139 = vsub.s32 1, %v138
    %v140 = vrot.slane %v83, %v139
    %v141 = vlaneseq
    %v142 = vshrl.u32 %v141, 7
    %v143 = vsub.s32 1, %v142
    %v144 = vrot.slane %v84, %v143
    %v145 = vlaneseq
    %v146 = vshrl.u32 %v145, 7
    %v147 = vsub.s32 1, %v146
    %v148 = vrot.slane %v85, %v147
    %v149 = vlaneseq
    %v150 = vshrl.u32 %v149, 7
    %v151 = vsub.s32 1, %v150
    %v152 = vrot.slane %v86, %v151
    %v153 = vlaneseq
    %v154 = vshrl.u32 %v153, 7
    %v155 = vsub.s32 1, %v154
    %v156 = vrot.slane %v87, %v155
    %v157 = vlaneseq
    %v158 = vshrl.u32 %v157, 7
    %v159 = vsub.s32 1, %v158
    %v160 = vrot.slane %v88, %v159
    %161 = vrot.lane.b32.xlu0 %v92, 127
    %v162 = vpop.permute.xlu0 %161
    %163 = vrot.lane.b32.xlu0 %v132, 127
    %v164 = vpop.permute.xlu0 %163
    %165 = vrot.lane.b32.xlu0 %v96, 127
    %v166 = vpop.permute.xlu0 %165
    %167 = vrot.lane.b32.xlu0 %v136, 127
    %v168 = vpop.permute.xlu0 %167
    %169 = vrot.lane.b32.xlu0 %v100, 127
    %v170 = vpop.permute.xlu0 %169
    %171 = vrot.lane.b32.xlu0 %v140, 127
    %v172 = vpop.permute.xlu0 %171
    %173 = vrot.lane.b32.xlu0 %v104, 127
    %v174 = vpop.permute.xlu0 %173
    %175 = vrot.lane.b32.xlu0 %v144, 127
    %v176 = vpop.permute.xlu0 %175
    %177 = vrot.lane.b32.xlu0 %v108, 127
    %v178 = vpop.permute.xlu0 %177
    %179 = vrot.lane.b32.xlu0 %v148, 127
    %v180 = vpop.permute.xlu0 %179
    %181 = vrot.lane.b32.xlu0 %v112, 127
    %v182 = vpop.permute.xlu0 %181
    %183 = vrot.lane.b32.xlu0 %v152, 127
    %v184 = vpop.permute.xlu0 %183
    %185 = vrot.lane.b32.xlu0 %v116, 127
    %v186 = vpop.permute.xlu0 %185
    %187 = vrot.lane.b32.xlu0 %v156, 127
    %v188 = vpop.permute.xlu0 %187
    %189 = vrot.lane.b32.xlu0 %v120, 127
    %v190 = vpop.permute.xlu0 %189
    %191 = vrot.lane.b32.xlu0 %v160, 127
    %v192 = vpop.permute.xlu0 %191
    %vm193 = vcmask 1039360
    %v194 = vsel %vm193, %v162, %v164
    %v195 = vsel %vm193, %v166, %v168
    %v196 = vsel %vm193, %v170, %v172
    %v197 = vsel %vm193, %v174, %v176
    %v198 = vsel %vm193, %v178, %v180
    %v199 = vsel %vm193, %v182, %v184
    %v200 = vsel %vm193, %v186, %v188
    %v201 = vsel %vm193, %v190, %v192
    %210 = vrot.lane.b32.xlu0 %v92, 126
    %v211 = vpop.permute.xlu0 %210
    %212 = vrot.lane.b32.xlu0 %v132, 126
    %v213 = vpop.permute.xlu0 %212
    %214 = vrot.lane.b32.xlu0 %v96, 126
    %v215 = vpop.permute.xlu0 %214
    %216 = vrot.lane.b32.xlu0 %v136, 126
    %v217 = vpop.permute.xlu0 %216
    %218 = vrot.lane.b32.xlu0 %v100, 126
    %v219 = vpop.permute.xlu0 %218
    %220 = vrot.lane.b32.xlu0 %v140, 126
    %v221 = vpop.permute.xlu0 %220
    %222 = vrot.lane.b32.xlu0 %v104, 126
    %v223 = vpop.permute.xlu0 %222
    %224 = vrot.lane.b32.xlu0 %v144, 126
    %v225 = vpop.permute.xlu0 %224
    %226 = vrot.lane.b32.xlu0 %v108, 126
    %v227 = vpop.permute.xlu0 %226
    %228 = vrot.lane.b32.xlu0 %v148, 126
    %v229 = vpop.permute.xlu0 %228
    %230 = vrot.lane.b32.xlu0 %v112, 126
    %v231 = vpop.permute.xlu0 %230
    %232 = vrot.lane.b32.xlu0 %v152, 126
    %v233 = vpop.permute.xlu0 %232
    %234 = vrot.lane.b32.xlu0 %v116, 126
    %v235 = vpop.permute.xlu0 %234
    %236 = vrot.lane.b32.xlu0 %v156, 126
    %v237 = vpop.permute.xlu0 %236
    %238 = vrot.lane.b32.xlu0 %v120, 126
    %v239 = vpop.permute.xlu0 %238
    %240 = vrot.lane.b32.xlu0 %v160, 126
    %v241 = vpop.permute.xlu0 %240
    %vm242 = vcmask 1031168
    %v243 = vsel %vm242, %v211, %v213
    %v244 = vsel %vm242, %v215, %v217
    %v245 = vsel %vm242, %v219, %v221
    %v246 = vsel %vm242, %v223, %v225
    %v247 = vsel %vm242, %v227, %v229
    %v248 = vsel %vm242, %v231, %v233
    %v249 = vsel %vm242, %v235, %v237
    %v250 = vsel %vm242, %v239, %v241
    %251 = vrot.lane.b32.xlu0 %v92, 125
    %v252 = vpop.permute.xlu0 %251
    %253 = vrot.lane.b32.xlu0 %v132, 125
    %v254 = vpop.permute.xlu0 %253
    %255 = vrot.lane.b32.xlu0 %v96, 125
    %v256 = vpop.permute.xlu0 %255
    %257 = vrot.lane.b32.xlu0 %v136, 125
    %v258 = vpop.permute.xlu0 %257
    %259 = vrot.lane.b32.xlu0 %v100, 125
    %v260 = vpop.permute.xlu0 %259
    %261 = vrot.lane.b32.xlu0 %v140, 125
    %v262 = vpop.permute.xlu0 %261
    %263 = vrot.lane.b32.xlu0 %v104, 125
    %v264 = vpop.permute.xlu0 %263
    %265 = vrot.lane.b32.xlu0 %v144, 125
    %v266 = vpop.permute.xlu0 %265
    %267 = vrot.lane.b32.xlu0 %v108, 125
    %v268 = vpop.permute.xlu0 %267
    %269 = vrot.lane.b32.xlu0 %v148, 125
    %v270 = vpop.permute.xlu0 %269
    %271 = vrot.lane.b32.xlu0 %v112, 125
    %v272 = vpop.permute.xlu0 %271
    %273 = vrot.lane.b32.xlu0 %v152, 125
    %v274 = vpop.permute.xlu0 %273
    %275 = vrot.lane.b32.xlu0 %v116, 125
    %v276 = vpop.permute.xlu0 %275
    %277 = vrot.lane.b32.xlu0 %v156, 125
    %v278 = vpop.permute.xlu0 %277
    %279 = vrot.lane.b32.xlu0 %v120, 125
    %v280 = vpop.permute.xlu0 %279
    %281 = vrot.lane.b32.xlu0 %v160, 125
    %v282 = vpop.permute.xlu0 %281
    %vm283 = vcmask 1022976
    %v284 = vsel %vm283, %v252, %v254
    %v285 = vsel %vm283, %v256, %v258
    %v286 = vsel %vm283, %v260, %v262
    %v287 = vsel %vm283, %v264, %v266
    %v288 = vsel %vm283, %v268, %v270
    %v289 = vsel %vm283, %v272, %v274
    %v290 = vsel %vm283, %v276, %v278
    %v291 = vsel %vm283, %v280, %v282
    %300 = vrot.lane.b32.xlu0 %v92, 124
    %v301 = vpop.permute.xlu0 %300
    %302 = vrot.lane.b32.xlu0 %v132, 124
    %v303 = vpop.permute.xlu0 %302
    %304 = vrot.lane.b32.xlu0 %v96, 124
    %v305 = vpop.permute.xlu0 %304
    %306 = vrot.lane.b32.xlu0 %v136, 124
    %v307 = vpop.permute.xlu0 %306
    %308 = vrot.lane.b32.xlu0 %v100, 124
    %v309 = vpop.permute.xlu0 %308
    %310 = vrot.lane.b32.xlu0 %v140, 124
    %v311 = vpop.permute.xlu0 %310
    %312 = vrot.lane.b32.xlu0 %v104, 124
    %v313 = vpop.permute.xlu0 %312
    %314 = vrot.lane.b32.xlu0 %v144, 124
    %v315 = vpop.permute.xlu0 %314
    %316 = vrot.lane.b32.xlu0 %v108, 124
    %v317 = vpop.permute.xlu0 %316
    %318 = vrot.lane.b32.xlu0 %v148, 124
    %v319 = vpop.permute.xlu0 %318
    %320 = vrot.lane.b32.xlu0 %v112, 124
    %v321 = vpop.permute.xlu0 %320
    %322 = vrot.lane.b32.xlu0 %v152, 124
    %v323 = vpop.permute.xlu0 %322
    %324 = vrot.lane.b32.xlu0 %v116, 124
    %v325 = vpop.permute.xlu0 %324
    %326 = vrot.lane.b32.xlu0 %v156, 124
    %v327 = vpop.permute.xlu0 %326
    %328 = vrot.lane.b32.xlu0 %v120, 124
    %v329 = vpop.permute.xlu0 %328
    %330 = vrot.lane.b32.xlu0 %v160, 124
    %v331 = vpop.permute.xlu0 %330
    %vm332 = vcmask 1014784
    %v333 = vsel %vm332, %v301, %v303
    %v334 = vsel %vm332, %v305, %v307
    %v335 = vsel %vm332, %v309, %v311
    %v336 = vsel %vm332, %v313, %v315
    %v337 = vsel %vm332, %v317, %v319
    %v338 = vsel %vm332, %v321, %v323
    %v339 = vsel %vm332, %v325, %v327
    %v340 = vsel %vm332, %v329, %v331
    %341 = vrot.lane.b32.xlu0 %v92, 123
    %v342 = vpop.permute.xlu0 %341
    %343 = vrot.lane.b32.xlu0 %v132, 123
    %v344 = vpop.permute.xlu0 %343
    %345 = vrot.lane.b32.xlu0 %v96, 123
    %v346 = vpop.permute.xlu0 %345
    %347 = vrot.lane.b32.xlu0 %v136, 123
    %v348 = vpop.permute.xlu0 %347
    %349 = vrot.lane.b32.xlu0 %v100, 123
    %v350 = vpop.permute.xlu0 %349
    %351 = vrot.lane.b32.xlu0 %v140, 123
    %v352 = vpop.permute.xlu0 %351
    %353 = vrot.lane.b32.xlu0 %v104, 123
    %v354 = vpop.permute.xlu0 %353
    %355 = vrot.lane.b32.xlu0 %v144, 123
    %v356 = vpop.permute.xlu0 %355
    %357 = vrot.lane.b32.xlu0 %v108, 123
    %v358 = vpop.permute.xlu0 %357
    %359 = vrot.lane.b32.xlu0 %v148, 123
    %v360 = vpop.permute.xlu0 %359
    %361 = vrot.lane.b32.xlu0 %v112, 123
    %v362 = vpop.permute.xlu0 %361
    %363 = vrot.lane.b32.xlu0 %v152, 123
    %v364 = vpop.permute.xlu0 %363
    %365 = vrot.lane.b32.xlu0 %v116, 123
    %v366 = vpop.permute.xlu0 %365
    %367 = vrot.lane.b32.xlu0 %v156, 123
    %v368 = vpop.permute.xlu0 %367
    %369 = vrot.lane.b32.xlu0 %v120, 123
    %v370 = vpop.permute.xlu0 %369
    %371 = vrot.lane.b32.xlu0 %v160, 123
    %v372 = vpop.permute.xlu0 %371
    %vm373 = vcmask 1006592
    %v374 = vsel %vm373, %v342, %v344
    %v375 = vsel %vm373, %v346, %v348
    %v376 = vsel %vm373, %v350, %v352
    %v377 = vsel %vm373, %v354, %v356
    %v378 = vsel %vm373, %v358, %v360
    %v379 = vsel %vm373, %v362, %v364
    %v380 = vsel %vm373, %v366, %v368
    %v381 = vsel %vm373, %v370, %v372
    %390 = vrot.lane.b32.xlu0 %v92, 122
    %v391 = vpop.permute.xlu0 %390
    %392 = vrot.lane.b32.xlu0 %v132, 122
    %v393 = vpop.permute.xlu0 %392
    %394 = vrot.lane.b32.xlu0 %v96, 122
    %v395 = vpop.permute.xlu0 %394
    %396 = vrot.lane.b32.xlu0 %v136, 122
    %v397 = vpop.permute.xlu0 %396
    %398 = vrot.lane.b32.xlu0 %v100, 122
    %v399 = vpop.permute.xlu0 %398
    %400 = vrot.lane.b32.xlu0 %v140, 122
    %v401 = vpop.permute.xlu0 %400
    %402 = vrot.lane.b32.xlu0 %v104, 122
    %v403 = vpop.permute.xlu0 %402
    %404 = vrot.lane.b32.xlu0 %v144, 122
    %v405 = vpop.permute.xlu0 %404
    %406 = vrot.lane.b32.xlu0 %v108, 122
    %v407 = vpop.permute.xlu0 %406
    %408 = vrot.lane.b32.xlu0 %v148, 122
    %v409 = vpop.permute.xlu0 %408
    %410 = vrot.lane.b32.xlu0 %v112, 122
    %v411 = vpop.permute.xlu0 %410
    %412 = vrot.lane.b32.xlu0 %v152, 122
    %v413 = vpop.permute.xlu0 %412
    %414 = vrot.lane.b32.xlu0 %v116, 122
    %v415 = vpop.permute.xlu0 %414
    %416 = vrot.lane.b32.xlu0 %v156, 122
    %v417 = vpop.permute.xlu0 %416
    %418 = vrot.lane.b32.xlu0 %v120, 122
    %v419 = vpop.permute.xlu0 %418
    %420 = vrot.lane.b32.xlu0 %v160, 122
    %v421 = vpop.permute.xlu0 %420
    %vm422 = vcmask 998400
    %v423 = vsel %vm422, %v391, %v393
    %v424 = vsel %vm422, %v395, %v397
    %v425 = vsel %vm422, %v399, %v401
    %v426 = vsel %vm422, %v403, %v405
    %v427 = vsel %vm422, %v407, %v409
    %v428 = vsel %vm422, %v411, %v413
    %v429 = vsel %vm422, %v415, %v417
    %v430 = vsel %vm422, %v419, %v421
    %431 = vrot.lane.b32.xlu0 %v92, 121
    %v432 = vpop.permute.xlu0 %431
    %433 = vrot.lane.b32.xlu0 %v132, 121
    %v434 = vpop.permute.xlu0 %433
    %435 = vrot.lane.b32.xlu0 %v96, 121
    %v436 = vpop.permute.xlu0 %435
    %437 = vrot.lane.b32.xlu0 %v136, 121
    %v438 = vpop.permute.xlu0 %437
    %439 = vrot.lane.b32.xlu0 %v100, 121
    %v440 = vpop.permute.xlu0 %439
    %441 = vrot.lane.b32.xlu0 %v140, 121
    %v442 = vpop.permute.xlu0 %441
    %443 = vrot.lane.b32.xlu0 %v104, 121
    %v444 = vpop.permute.xlu0 %443
    %445 = vrot.lane.b32.xlu0 %v144, 121
    %v446 = vpop.permute.xlu0 %445
    %447 = vrot.lane.b32.xlu0 %v108, 121
    %v448 = vpop.permute.xlu0 %447
    %449 = vrot.lane.b32.xlu0 %v148, 121
    %v450 = vpop.permute.xlu0 %449
    %451 = vrot.lane.b32.xlu0 %v112, 121
    %v452 = vpop.permute.xlu0 %451
    %453 = vrot.lane.b32.xlu0 %v152, 121
    %v454 = vpop.permute.xlu0 %453
    %455 = vrot.lane.b32.xlu0 %v116, 121
    %v456 = vpop.permute.xlu0 %455
    %457 = vrot.lane.b32.xlu0 %v156, 121
    %v458 = vpop.permute.xlu0 %457
    %459 = vrot.lane.b32.xlu0 %v120, 121
    %v460 = vpop.permute.xlu0 %459
    %461 = vrot.lane.b32.xlu0 %v160, 121
    %v462 = vpop.permute.xlu0 %461
    %vm463 = vcmask 990208
    %v464 = vsel %vm463, %v432, %v434
    %v465 = vsel %vm463, %v436, %v438
    %v466 = vsel %vm463, %v440, %v442
    %v467 = vsel %vm463, %v444, %v446
    %v468 = vsel %vm463, %v448, %v450
    %v469 = vsel %vm463, %v452, %v454
    %v470 = vsel %vm463, %v456, %v458
    %v471 = vsel %vm463, %v460, %v462
    %480 = vrot.lane.b32.xlu0 %v92, 120
    %v481 = vpop.permute.xlu0 %480
    %482 = vrot.lane.b32.xlu0 %v132, 120
    %v483 = vpop.permute.xlu0 %482
    %484 = vrot.lane.b32.xlu0 %v96, 120
    %v485 = vpop.permute.xlu0 %484
    %486 = vrot.lane.b32.xlu0 %v136, 120
    %v487 = vpop.permute.xlu0 %486
    %488 = vrot.lane.b32.xlu0 %v100, 120
    %v489 = vpop.permute.xlu0 %488
    %490 = vrot.lane.b32.xlu0 %v140, 120
    %v491 = vpop.permute.xlu0 %490
    %492 = vrot.lane.b32.xlu0 %v104, 120
    %v493 = vpop.permute.xlu0 %492
    %494 = vrot.lane.b32.xlu0 %v144, 120
    %v495 = vpop.permute.xlu0 %494
    %496 = vrot.lane.b32.xlu0 %v108, 120
    %v497 = vpop.permute.xlu0 %496
    %498 = vrot.lane.b32.xlu0 %v148, 120
    %v499 = vpop.permute.xlu0 %498
    %500 = vrot.lane.b32.xlu0 %v112, 120
    %v501 = vpop.permute.xlu0 %500
    %502 = vrot.lane.b32.xlu0 %v152, 120
    %v503 = vpop.permute.xlu0 %502
    %504 = vrot.lane.b32.xlu0 %v116, 120
    %v505 = vpop.permute.xlu0 %504
    %506 = vrot.lane.b32.xlu0 %v156, 120
    %v507 = vpop.permute.xlu0 %506
    %508 = vrot.lane.b32.xlu0 %v120, 120
    %v509 = vpop.permute.xlu0 %508
    %510 = vrot.lane.b32.xlu0 %v160, 120
    %v511 = vpop.permute.xlu0 %510
    %vm512 = vcmask 982016
    %v513 = vsel %vm512, %v481, %v483
    %v514 = vsel %vm512, %v485, %v487
    %v515 = vsel %vm512, %v489, %v491
    %v516 = vsel %vm512, %v493, %v495
    %v517 = vsel %vm512, %v497, %v499
    %v518 = vsel %vm512, %v501, %v503
    %v519 = vsel %vm512, %v505, %v507
    %v520 = vsel %vm512, %v509, %v511
    %vm521 = vcmask 1040384
    %vm522 = vsmask.f32 256
    %vm523 = vmand %vm521, %vm522
    %v524 = vsel %vm523, %v92, %v194
    %v525 = vsel %vm523, %v96, %v195
    %v526 = vsel %vm523, %v100, %v196
    %v527 = vsel %vm523, %v104, %v197
    %v528 = vsel %vm523, %v108, %v198
    %v529 = vsel %vm523, %v112, %v199
    %v530 = vsel %vm523, %v116, %v200
    %v531 = vsel %vm523, %v120, %v201
    %vm532 = vcmask 1040384
    %v535 = vsel %vm532, %v524, %v243
    %v539 = vsel %vm532, %v525, %v244
    %v543 = vsel %vm532, %v526, %v245
    %v547 = vsel %vm532, %v527, %v246
    %v551 = vsel %vm532, %v528, %v247
    %v555 = vsel %vm532, %v529, %v248
    %v559 = vsel %vm532, %v530, %v249
    %v563 = vsel %vm532, %v531, %v250
    %vm565 = vcmask 1041408
    %vm566 = vsmask.f32 1280
    %vm567 = vmand %vm565, %vm566
    %v568 = vsel %vm567, %v535, %v284
    %v569 = vsel %vm567, %v539, %v285
    %v570 = vsel %vm567, %v543, %v286
    %v571 = vsel %vm567, %v547, %v287
    %v572 = vsel %vm567, %v551, %v288
    %v573 = vsel %vm567, %v555, %v289
    %v574 = vsel %vm567, %v559, %v290
    %v575 = vsel %vm567, %v563, %v291
    %vm576 = vcmask 1041408
    %v579 = vsel %vm576, %v568, %v333
    %v583 = vsel %vm576, %v569, %v334
    %v587 = vsel %vm576, %v570, %v335
    %v591 = vsel %vm576, %v571, %v336
    %v595 = vsel %vm576, %v572, %v337
    %v599 = vsel %vm576, %v573, %v338
    %v603 = vsel %vm576, %v574, %v339
    %v607 = vsel %vm576, %v575, %v340
    %vm609 = vcmask 1042432
    %vm610 = vsmask.f32 2304
    %vm611 = vmand %vm609, %vm610
    %v612 = vsel %vm611, %v579, %v374
    %v613 = vsel %vm611, %v583, %v375
    %v614 = vsel %vm611, %v587, %v376
    %v615 = vsel %vm611, %v591, %v377
    %v616 = vsel %vm611, %v595, %v378
    %v617 = vsel %vm611, %v599, %v379
    %v618 = vsel %vm611, %v603, %v380
    %v619 = vsel %vm611, %v607, %v381
    %vm620 = vcmask 1042432
    %v623 = vsel %vm620, %v612, %v423
    %v627 = vsel %vm620, %v613, %v424
    %v631 = vsel %vm620, %v614, %v425
    %v635 = vsel %vm620, %v615, %v426
    %v639 = vsel %vm620, %v616, %v427
    %v643 = vsel %vm620, %v617, %v428
    %v647 = vsel %vm620, %v618, %v429
    %v651 = vsel %vm620, %v619, %v430
    %vm653 = vcmask 1043456
    %vm654 = vsmask.f32 3328
    %vm655 = vmand %vm653, %vm654
    %v656 = vsel %vm655, %v623, %v464
    %v657 = vsel %vm655, %v627, %v465
    %v658 = vsel %vm655, %v631, %v466
    %v659 = vsel %vm655, %v635, %v467
    %v660 = vsel %vm655, %v639, %v468
    %v661 = vsel %vm655, %v643, %v469
    %v662 = vsel %vm655, %v647, %v470
    %v663 = vsel %vm655, %v651, %v471
    %vm664 = vcmask 1043456
    %v667 = vsel %vm664, %v656, %v513
    %v670 = vsel %vm664, %v657, %v514
    %v673 = vsel %vm664, %v658, %v515
    %v676 = vsel %vm664, %v659, %v516
    %v679 = vsel %vm664, %v660, %v517
    %v682 = vsel %vm664, %v661, %v518
    %v685 = vsel %vm664, %v662, %v519
    %v688 = vsel %vm664, %v663, %v520
    %v689 = vld [vmem:[#allocation5] sm:$0xf]
    %v690 = vld [vmem:[#allocation5 + $0x4] sm:$0xf]
    %v693 = vunpack.c.l.b16 %v689
    %v694 = vunpack.c.l.b16 %v690
    %v695 = vpack.c.b16 %v694, %v693
    %vm696 = vcmask 72704
    %v698 = vsel %vm696, %v695, 0
    %vm700 = vcmask 1044480
    %v701 = vsel %vm664, 4294967295, 65535
    %v702 = vsel %vm700, %v701, 0
    %v703 = vand.u32 %v667, %v702
    %705 = vmatprep.subr.bf16.mxu0 0
    %706 = vmatpush1.bf16.msra.mxu0 %v703
    %707 = vmatprep.subr.bf16.mxu0 0
    %708 = vmatpush1.bf16.msra.mxu0 0
    %709 = vmatprep.subr.bf16.mxu0 0
    %710 = vmatpush1.bf16.msra.mxu0 0
    %711 = vmatprep.subr.bf16.mxu0 0
    %712 = vmatpush1.bf16.msra.mxu0 0
    %713 = vmatprep.subr.bf16.mxu0 0
    %714 = vmatpush1.bf16.msra.mxu0 0
    %715 = vmatprep.subr.bf16.mxu0 0
    %716 = vmatpush1.bf16.msra.mxu0 0
    %717 = vmatprep.subr.bf16.mxu0 0
    %718 = vmatpush1.bf16.msra.mxu0 0
    %719 = vmatprep.subr.bf16.mxu0 0
    %720 = vmatpush1.bf16.msra.mxu0 0
    %721 = vmatprep.subr.bf16.mxu0 0
    %722 = vmatpush1.bf16.msra.mxu0 0
    %723 = vmatprep.subr.bf16.mxu0 0
    %724 = vmatpush1.bf16.msra.mxu0 0
    %725 = vmatprep.subr.bf16.mxu0 0
    %726 = vmatpush1.bf16.msra.mxu0 0
    %727 = vmatprep.subr.bf16.mxu0 0
    %728 = vmatpush1.bf16.msra.mxu0 0
    %729 = vmatprep.subr.bf16.mxu0 0
    %730 = vmatpush1.bf16.msra.mxu0 0
    %731 = vmatprep.subr.bf16.mxu0 0
    %732 = vmatpush1.bf16.msra.mxu0 0
    %733 = vmatprep.subr.bf16.mxu0 0
    %734 = vmatpush1.bf16.msra.mxu0 0
    %735 = vmatprep.subr.bf16.mxu0 0
    %736 = vmatpush1.bf16.msra.mxu0 0
    %737 = vmatprep.mubr.bf16.mxu0 0
    %738 = vmatmul.mubr.bf16.gmra.mrb[0].mxu0 %v698
    %v739 = vpop.f32.mrb[0].mxu0
    %v740 = vadd.f32 0.0, %v739
    %v741 = vpop.f32.mrb[0].mxu0
    %v742 = vpop.f32.mrb[0].mxu0
    %v743 = vadd.f32 0.0, %v742
    %v744 = vpop.f32.mrb[0].mxu0
    %745 = vdwg.mxu0
    %v746 = vand.u32 %v670, %v702
    %748 = vmatprep.subr.bf16.mxu0 0
    %749 = vmatpush1.bf16.msra.mxu0 %v746
    %750 = vmatprep.subr.bf16.mxu0 0
    %751 = vmatpush1.bf16.msra.mxu0 0
    %752 = vmatprep.subr.bf16.mxu0 0
    %753 = vmatpush1.bf16.msra.mxu0 0
    %754 = vmatprep.subr.bf16.mxu0 0
    %755 = vmatpush1.bf16.msra.mxu0 0
    %756 = vmatprep.subr.bf16.mxu0 0
    %757 = vmatpush1.bf16.msra.mxu0 0
    %758 = vmatprep.subr.bf16.mxu0 0
    %759 = vmatpush1.bf16.msra.mxu0 0
    %760 = vmatprep.subr.bf16.mxu0 0
    %761 = vmatpush1.bf16.msra.mxu0 0
    %762 = vmatprep.subr.bf16.mxu0 0
    %763 = vmatpush1.bf16.msra.mxu0 0
    %764 = vmatprep.subr.bf16.mxu0 0
    %765 = vmatpush1.bf16.msra.mxu0 0
    %766 = vmatprep.subr.bf16.mxu0 0
    %767 = vmatpush1.bf16.msra.mxu0 0
    %768 = vmatprep.subr.bf16.mxu0 0
    %769 = vmatpush1.bf16.msra.mxu0 0
    %770 = vmatprep.subr.bf16.mxu0 0
    %771 = vmatpush1.bf16.msra.mxu0 0
    %772 = vmatprep.subr.bf16.mxu0 0
    %773 = vmatpush1.bf16.msra.mxu0 0
    %774 = vmatprep.subr.bf16.mxu0 0
    %775 = vmatpush1.bf16.msra.mxu0 0
    %776 = vmatprep.subr.bf16.mxu0 0
    %777 = vmatpush1.bf16.msra.mxu0 0
    %778 = vmatprep.subr.bf16.mxu0 0
    %779 = vmatpush1.bf16.msra.mxu0 0
    %780 = vmatprep.mubr.bf16.mxu0 0
    %781 = vmatmul.mubr.bf16.gmra.mrb[0].mxu0 %v698
    %v782 = vpop.f32.mrb[0].mxu0
    %v783 = vadd.f32 0.0, %v782
    %v784 = vpop.f32.mrb[0].mxu0
    %v785 = vpop.f32.mrb[0].mxu0
    %v786 = vadd.f32 0.0, %v785
    %v787 = vpop.f32.mrb[0].mxu0
    %788 = vdwg.mxu0
    %v789 = vand.u32 %v673, %v702
    %791 = vmatprep.subr.bf16.mxu0 0
    %792 = vmatpush1.bf16.msra.mxu0 %v789
    %793 = vmatprep.subr.bf16.mxu0 0
    %794 = vmatpush1.bf16.msra.mxu0 0
    %795 = vmatprep.subr.bf16.mxu0 0
    %796 = vmatpush1.bf16.msra.mxu0 0
    %797 = vmatprep.subr.bf16.mxu0 0
    %798 = vmatpush1.bf16.msra.mxu0 0
    %799 = vmatprep.subr.bf16.mxu0 0
    %800 = vmatpush1.bf16.msra.mxu0 0
    %801 = vmatprep.subr.bf16.mxu0 0
    %802 = vmatpush1.bf16.msra.mxu0 0
    %803 = vmatprep.subr.bf16.mxu0 0
    %804 = vmatpush1.bf16.msra.mxu0 0
    %805 = vmatprep.subr.bf16.mxu0 0
    %806 = vmatpush1.bf16.msra.mxu0 0
    %807 = vmatprep.subr.bf16.mxu0 0
    %808 = vmatpush1.bf16.msra.mxu0 0
    %809 = vmatprep.subr.bf16.mxu0 0
    %810 = vmatpush1.bf16.msra.mxu0 0
    %811 = vmatprep.subr.bf16.mxu0 0
    %812 = vmatpush1.bf16.msra.mxu0 0
    %813 = vmatprep.subr.bf16.mxu0 0
    %814 = vmatpush1.bf16.msra.mxu0 0
    %815 = vmatprep.subr.bf16.mxu0 0
    %816 = vmatpush1.bf16.msra.mxu0 0
    %817 = vmatprep.subr.bf16.mxu0 0
    %818 = vmatpush1.bf16.msra.mxu0 0
    %819 = vmatprep.subr.bf16.mxu0 0
    %820 = vmatpush1.bf16.msra.mxu0 0
    %821 = vmatprep.subr.bf16.mxu0 0
    %822 = vmatpush1.bf16.msra.mxu0 0
    %823 = vmatprep.mubr.bf16.mxu0 0
    %824 = vmatmul.mubr.bf16.gmra.mrb[0].mxu0 %v698
    %v825 = vpop.f32.mrb[0].mxu0
    %v826 = vadd.f32 0.0, %v825
    %v827 = vpop.f32.mrb[0].mxu0
    %v828 = vpop.f32.mrb[0].mxu0
    %v829 = vadd.f32 0.0, %v828
    %v830 = vpop.f32.mrb[0].mxu0
    %831 = vdwg.mxu0
    %v832 = vand.u32 %v676, %v702
    %834 = vmatprep.subr.bf16.mxu0 0
    %835 = vmatpush1.bf16.msra.mxu0 %v832
    %836 = vmatprep.subr.bf16.mxu0 0
    %837 = vmatpush1.bf16.msra.mxu0 0
    %838 = vmatprep.subr.bf16.mxu0 0
    %839 = vmatpush1.bf16.msra.mxu0 0
    %840 = vmatprep.subr.bf16.mxu0 0
    %841 = vmatpush1.bf16.msra.mxu0 0
    %842 = vmatprep.subr.bf16.mxu0 0
    %843 = vmatpush1.bf16.msra.mxu0 0
    %844 = vmatprep.subr.bf16.mxu0 0
    %845 = vmatpush1.bf16.msra.mxu0 0
    %846 = vmatprep.subr.bf16.mxu0 0
    %847 = vmatpush1.bf16.msra.mxu0 0
    %848 = vmatprep.subr.bf16.mxu0 0
    %849 = vmatpush1.bf16.msra.mxu0 0
    %850 = vmatprep.subr.bf16.mxu0 0
    %851 = vmatpush1.bf16.msra.mxu0 0
    %852 = vmatprep.subr.bf16.mxu0 0
    %853 = vmatpush1.bf16.msra.mxu0 0
    %854 = vmatprep.subr.bf16.mxu0 0
    %855 = vmatpush1.bf16.msra.mxu0 0
    %856 = vmatprep.subr.bf16.mxu0 0
    %857 = vmatpush1.bf16.msra.mxu0 0
    %858 = vmatprep.subr.bf16.mxu0 0
    %859 = vmatpush1.bf16.msra.mxu0 0
    %860 = vmatprep.subr.bf16.mxu0 0
    %861 = vmatpush1.bf16.msra.mxu0 0
    %862 = vmatprep.subr.bf16.mxu0 0
    %863 = vmatpush1.bf16.msra.mxu0 0
    %864 = vmatprep.subr.bf16.mxu0 0
    %865 = vmatpush1.bf16.msra.mxu0 0
    %866 = vmatprep.mubr.bf16.mxu0 0
    %867 = vmatmul.mubr.bf16.gmra.mrb[0].mxu0 %v698
    %v868 = vpop.f32.mrb[0].mxu0
    %v869 = vadd.f32 0.0, %v868
    %v870 = vpop.f32.mrb[0].mxu0
    %v871 = vpop.f32.mrb[0].mxu0
    %v872 = vadd.f32 0.0, %v871
    %v873 = vpop.f32.mrb[0].mxu0
    %874 = vdwg.mxu0
    %v875 = vand.u32 %v679, %v702
    %877 = vmatprep.subr.bf16.mxu0 0
    %878 = vmatpush1.bf16.msra.mxu0 %v875
    %879 = vmatprep.subr.bf16.mxu0 0
    %880 = vmatpush1.bf16.msra.mxu0 0
    %881 = vmatprep.subr.bf16.mxu0 0
    %882 = vmatpush1.bf16.msra.mxu0 0
    %883 = vmatprep.subr.bf16.mxu0 0
    %884 = vmatpush1.bf16.msra.mxu0 0
    %885 = vmatprep.subr.bf16.mxu0 0
    %886 = vmatpush1.bf16.msra.mxu0 0
    %887 = vmatprep.subr.bf16.mxu0 0
    %888 = vmatpush1.bf16.msra.mxu0 0
    %889 = vmatprep.subr.bf16.mxu0 0
    %890 = vmatpush1.bf16.msra.mxu0 0
    %891 = vmatprep.subr.bf16.mxu0 0
    %892 = vmatpush1.bf16.msra.mxu0 0
    %893 = vmatprep.subr.bf16.mxu0 0
    %894 = vmatpush1.bf16.msra.mxu0 0
    %895 = vmatprep.subr.bf16.mxu0 0
    %896 = vmatpush1.bf16.msra.mxu0 0
    %897 = vmatprep.subr.bf16.mxu0 0
    %898 = vmatpush1.bf16.msra.mxu0 0
    %899 = vmatprep.subr.bf16.mxu0 0
    %900 = vmatpush1.bf16.msra.mxu0 0
    %901 = vmatprep.subr.bf16.mxu0 0
    %902 = vmatpush1.bf16.msra.mxu0 0
    %903 = vmatprep.subr.bf16.mxu0 0
    %904 = vmatpush1.bf16.msra.mxu0 0
    %905 = vmatprep.subr.bf16.mxu0 0
    %906 = vmatpush1.bf16.msra.mxu0 0
    %907 = vmatprep.subr.bf16.mxu0 0
    %908 = vmatpush1.bf16.msra.mxu0 0
    %909 = vmatprep.mubr.bf16.mxu0 0
    %910 = vmatmul.mubr.bf16.gmra.mrb[0].mxu0 %v698
    %v911 = vpop.f32.mrb[0].mxu0
    %v912 = vadd.f32 0.0, %v911
    %v913 = vpop.f32.mrb[0].mxu0
    %v914 = vpop.f32.mrb[0].mxu0
    %v915 = vadd.f32 0.0, %v914
    %v916 = vpop.f32.mrb[0].mxu0
    %917 = vdwg.mxu0
    %v918 = vand.u32 %v682, %v702
    %920 = vmatprep.subr.bf16.mxu0 0
    %921 = vmatpush1.bf16.msra.mxu0 %v918
    %922 = vmatprep.subr.bf16.mxu0 0
    %923 = vmatpush1.bf16.msra.mxu0 0
    %924 = vmatprep.subr.bf16.mxu0 0
    %925 = vmatpush1.bf16.msra.mxu0 0
    %926 = vmatprep.subr.bf16.mxu0 0
    %927 = vmatpush1.bf16.msra.mxu0 0
    %928 = vmatprep.subr.bf16.mxu0 0
    %929 = vmatpush1.bf16.msra.mxu0 0
    %930 = vmatprep.subr.bf16.mxu0 0
    %931 = vmatpush1.bf16.msra.mxu0 0
    %932 = vmatprep.subr.bf16.mxu0 0
    %933 = vmatpush1.bf16.msra.mxu0 0
    %934 = vmatprep.subr.bf16.mxu0 0
    %935 = vmatpush1.bf16.msra.mxu0 0
    %936 = vmatprep.subr.bf16.mxu0 0
    %937 = vmatpush1.bf16.msra.mxu0 0
    %938 = vmatprep.subr.bf16.mxu0 0
    %939 = vmatpush1.bf16.msra.mxu0 0
    %940 = vmatprep.subr.bf16.mxu0 0
    %941 = vmatpush1.bf16.msra.mxu0 0
    %942 = vmatprep.subr.bf16.mxu0 0
    %943 = vmatpush1.bf16.msra.mxu0 0
    %944 = vmatprep.subr.bf16.mxu0 0
    %945 = vmatpush1.bf16.msra.mxu0 0
    %946 = vmatprep.subr.bf16.mxu0 0
    %947 = vmatpush1.bf16.msra.mxu0 0
    %948 = vmatprep.subr.bf16.mxu0 0
    %949 = vmatpush1.bf16.msra.mxu0 0
    %950 = vmatprep.subr.bf16.mxu0 0
    %951 = vmatpush1.bf16.msra.mxu0 0
    %952 = vmatprep.mubr.bf16.mxu0 0
    %953 = vmatmul.mubr.bf16.gmra.mrb[0].mxu0 %v698
    %v954 = vpop.f32.mrb[0].mxu0
    %v955 = vadd.f32 0.0, %v954
    %v956 = vpop.f32.mrb[0].mxu0
    %v957 = vpop.f32.mrb[0].mxu0
    %v958 = vadd.f32 0.0, %v957
    %v959 = vpop.f32.mrb[0].mxu0
    %960 = vdwg.mxu0
    %v961 = vand.u32 %v685, %v702
    %963 = vmatprep.subr.bf16.mxu0 0
    %964 = vmatpush1.bf16.msra.mxu0 %v961
    %965 = vmatprep.subr.bf16.mxu0 0
    %966 = vmatpush1.bf16.msra.mxu0 0
    %967 = vmatprep.subr.bf16.mxu0 0
    %968 = vmatpush1.bf16.msra.mxu0 0
    %969 = vmatprep.subr.bf16.mxu0 0
    %970 = vmatpush1.bf16.msra.mxu0 0
    %971 = vmatprep.subr.bf16.mxu0 0
    %972 = vmatpush1.bf16.msra.mxu0 0
    %973 = vmatprep.subr.bf16.mxu0 0
    %974 = vmatpush1.bf16.msra.mxu0 0
    %975 = vmatprep.subr.bf16.mxu0 0
    %976 = vmatpush1.bf16.msra.mxu0 0
    %977 = vmatprep.subr.bf16.mxu0 0
    %978 = vmatpush1.bf16.msra.mxu0 0
    %979 = vmatprep.subr.bf16.mxu0 0
    %980 = vmatpush1.bf16.msra.mxu0 0
    %981 = vmatprep.subr.bf16.mxu0 0
    %982 = vmatpush1.bf16.msra.mxu0 0
    %983 = vmatprep.subr.bf16.mxu0 0
    %984 = vmatpush1.bf16.msra.mxu0 0
    %985 = vmatprep.subr.bf16.mxu0 0
    %986 = vmatpush1.bf16.msra.mxu0 0
    %987 = vmatprep.subr.bf16.mxu0 0
    %988 = vmatpush1.bf16.msra.mxu0 0
    %989 = vmatprep.subr.bf16.mxu0 0
    %990 = vmatpush1.bf16.msra.mxu0 0
    %991 = vmatprep.subr.bf16.mxu0 0
    %992 = vmatpush1.bf16.msra.mxu0 0
    %993 = vmatprep.subr.bf16.mxu0 0
    %994 = vmatpush1.bf16.msra.mxu0 0
    %995 = vmatprep.mubr.bf16.mxu0 0
    %996 = vmatmul.mubr.bf16.gmra.mrb[0].mxu0 %v698
    %v997 = vpop.f32.mrb[0].mxu0
    %v998 = vadd.f32 0.0, %v997
    %v999 = vpop.f32.mrb[0].mxu0
    %v1000 = vpop.f32.mrb[0].mxu0
    %v1001 = vadd.f32 0.0, %v1000
    %v1002 = vpop.f32.mrb[0].mxu0
    %1003 = vdwg.mxu0
    %v1004 = vand.u32 %v688, %v702
    %1006 = vmatprep.subr.bf16.mxu0 0
    %1007 = vmatpush1.bf16.msra.mxu0 %v1004
    %1008 = vmatprep.subr.bf16.mxu0 0
    %1009 = vmatpush1.bf16.msra.mxu0 0
    %1010 = vmatprep.subr.bf16.mxu0 0
    %1011 = vmatpush1.bf16.msra.mxu0 0
    %1012 = vmatprep.subr.bf16.mxu0 0
    %1013 = vmatpush1.bf16.msra.mxu0 0
    %1014 = vmatprep.subr.bf16.mxu0 0
    %1015 = vmatpush1.bf16.msra.mxu0 0
    %1016 = vmatprep.subr.bf16.mxu0 0
    %1017 = vmatpush1.bf16.msra.mxu0 0
    %1018 = vmatprep.subr.bf16.mxu0 0
    %1019 = vmatpush1.bf16.msra.mxu0 0
    %1020 = vmatprep.subr.bf16.mxu0 0
    %1021 = vmatpush1.bf16.msra.mxu0 0
    %1022 = vmatprep.subr.bf16.mxu0 0
    %1023 = vmatpush1.bf16.msra.mxu0 0
    %1024 = vmatprep.subr.bf16.mxu0 0
    %1025 = vmatpush1.bf16.msra.mxu0 0
    %1026 = vmatprep.subr.bf16.mxu0 0
    %1027 = vmatpush1.bf16.msra.mxu0 0
    %1028 = vmatprep.subr.bf16.mxu0 0
    %1029 = vmatpush1.bf16.msra.mxu0 0
    %1030 = vmatprep.subr.bf16.mxu0 0
    %1031 = vmatpush1.bf16.msra.mxu0 0
    %1032 = vmatprep.subr.bf16.mxu0 0
    %1033 = vmatpush1.bf16.msra.mxu0 0
    %1034 = vmatprep.subr.bf16.mxu0 0
    %1035 = vmatpush1.bf16.msra.mxu0 0
    %1036 = vmatprep.subr.bf16.mxu0 0
    %1037 = vmatpush1.bf16.msra.mxu0 0
    %1038 = vmatprep.mubr.bf16.mxu0 0
    %1039 = vmatmul.mubr.bf16.gmra.mrb[0].mxu0 %v698
    %v1040 = vpop.f32.mrb[0].mxu0
    %v1041 = vadd.f32 0.0, %v1040
    %v1042 = vpop.f32.mrb[0].mxu0
    %v1043 = vpop.f32.mrb[0].mxu0
    %v1044 = vadd.f32 0.0, %v1043
    %v1045 = vpop.f32.mrb[0].mxu0
    %1046 = vdwg.mxu0
    %1047 = vst [vmem:[#allocation7] sm:$0xff] %v740
    %1048 = vst [vmem:[#allocation7 + $0x8] sm:$0xff] %v783
    %1049 = vst [vmem:[#allocation7 + $0x10] sm:$0xff] %v826
    %1050 = vst [vmem:[#allocation7 + $0x18] sm:$0xff] %v869
    %1051 = vst [vmem:[#allocation7 + $0x20] sm:$0xff] %v912
    %1052 = vst [vmem:[#allocation7 + $0x28] sm:$0xff] %v955
    %1053 = vst [vmem:[#allocation7 + $0x30] sm:$0xff] %v998
    %1054 = vst [vmem:[#allocation7 + $0x38] sm:$0xff] %v1041
    %1055 = vst [vmem:[#allocation8] sm:$0xff] %v743
    %1056 = vst [vmem:[#allocation8 + $0x8] sm:$0xff] %v786
    %1057 = vst [vmem:[#allocation8 + $0x10] sm:$0xff] %v829
    %1058 = vst [vmem:[#allocation8 + $0x18] sm:$0xff] %v872
    %1059 = vst [vmem:[#allocation8 + $0x20] sm:$0xff] %v915
    %1060 = vst [vmem:[#allocation8 + $0x28] sm:$0xff] %v958
    %1061 = vst [vmem:[#allocation8 + $0x30] sm:$0xff] %v1001
    %1062 = vst [vmem:[#allocation8 + $0x38] sm:$0xff] %v1044
    // Predicated region
    $region18: #{tpu_custom_call.1} parent=1 // pred_check
      _
    $region19: #{tpu_custom_call.1} parent=1 // pred_check_branch
      %1064 = sbr.rel (0) target = $region21
    $region20: #{tpu_custom_call.1} parent=1 // pred_region
      %s1066 = ssub.s32 1024, 1024
      %1067 = vsyncadd [#allocation4], %s1066
      %s1068 = sshll.u32 [#allocation7], 4
      %s1069 = int_to_ptr.vmem [resolvable:$true] %s1068
      %1074 = dma.vmem_to_hbm [thread:$0]  %s1069, 1024, %s2, [#allocation4], 128, 128, 8
    $region21: #{tpu_custom_call.1} parent=1 // pred_fallthru
      _
    // Predicated region
    $region22: #{tpu_custom_call.1} parent=1 // pred_check
      _
    $region23: #{tpu_custom_call.1} parent=1 // pred_check_branch
      %1076 = sbr.rel (0) target = $region25
    $region24: #{tpu_custom_call.1} parent=1 // pred_region
      %s1078 = ssub.s32 1024, 1024
      %1079 = vsyncadd [#allocation9], %s1078
      %s1080 = sshll.u32 [#allocation8], 4
      %s1081 = int_to_ptr.vmem [resolvable:$true] %s1080
      %1086 = dma.vmem_to_hbm [thread:$0]  %s1081, 1024, %s3, [#allocation9], 128, 128, 8
    $region25: #{tpu_custom_call.1} parent=1 // pred_fallthru
      _
    // Predicated region
    $region26: #{tpu_custom_call.1} parent=1 // pred_check
      _
    $region27: #{tpu_custom_call.1} parent=1 // pred_check_branch
      %1088 = sbr.rel (0) target = $region29
    $region28: #{tpu_custom_call.1} parent=1 // pred_region
      %1089 = dma.done [#allocation4], 1024
    $region29: #{tpu_custom_call.1} parent=1 // pred_fallthru
      _
    // Predicated region
    $region30: #{tpu_custom_call.1} parent=1 // pred_check
      _
    $region31: #{tpu_custom_call.1} parent=1 // pred_check_branch
      %1091 = sbr.rel (0) target = $region33
    $region32: #{tpu_custom_call.1} parent=1 // pred_region
      %1092 = dma.done [#allocation9], 1024
    $region33: #{tpu_custom_call.1} parent=1 // pred_fallthru
      _
    %1093 = vsyncpa [#allocation3], 1
    %1094 = vsyncpa [#allocation6], 1
    %1095 = vsyncpa [#allocation4], 1
    %1096 = vsyncpa [#allocation9], 1

</llo_original>
